<compile_context>
chip_gen: v6e
topology: v6e:2x2x1
jax: 0.10.0
libtpu: 0.0.40
codegen_flags: <defaults>
</compile_context>

<pallas_src>
import jax
import jax.numpy as jnp
from jax.experimental import pallas as pl
from jax.experimental.pallas import tpu as pltpu


def _round_up(a: int, b: int) -> int:
    return ((a + b - 1) // b) * b


def _pick_tm(M: int) -> int:
    """Row-tile size: multiple of 8, >=2 grid blocks where possible (dual-TC
    on v7x), minimal padded-row waste, capped at 512 (safe on all gens)."""
    M8 = _round_up(M, 8)
    if M8 <= 16:
        return 8
    if M8 <= 1024:
        # Split into two blocks: both v7x TensorCores get work, <=7 wasted rows.
        return _round_up((M8 + 1) // 2, 8)
    best_tm, best_key = 512, None
    for tm in (512, 256, 128):
        waste = _round_up(M8, tm) - M8
        key = (waste, -tm)                # minimize waste, then prefer bigger tile
        if best_key is None or key < best_key:
            best_key, best_tm = key, tm
    return best_tm


def _make_kernel(tn: int, hp: int):
    """Fused residual + linear for one (tm, tn) output tile:
    o = x[:, cols] + x @ W[:, cols] + b[cols]."""

    def kernel(x_ref, w_ref, b_ref, o_ref):
        x = x_ref[...]                                   # (tm, Hp), native dtype
        # MXU matmul in the activation dtype (bf16 in production, f32 here),
        # always with f32 accumulation.
        y = jnp.dot(x, w_ref[...], preferred_element_type=jnp.float32)
        if tn == hp:                                     # W fully VMEM-resident
            x_cols = x
        else:                                            # N-tiled W: this block's columns
            col0 = pl.multiple_of(pl.program_id(1) * tn, 128)
            x_cols = x_ref[:, pl.ds(col0, tn)]
        # Residual + bias epilogue in f32, store in the output's native dtype.
        o_ref[...] = (x_cols.astype(jnp.float32) + y + b_ref[...]).astype(o_ref.dtype)

    return kernel


@jax.jit
def skip_connection_forward(x, w, b, mask=None):
    """SkipConnection.forward: x + Linear(x).  x: (B, S, H), w: (H, H), b: (H,)."""
    del mask  # TODO(synk): generic wrapped module may consume mask; Linear does not.
    B, S, H = x.shape
    M = B * S
    cdt = x.dtype                          # compute / I-O dtype (bf16 in production)
    esize = jnp.dtype(cdt).itemsize
    Hp = _round_up(H, 128)

    # ---- operand prep (no x copy in the lane-aligned production case) ----
    x2d = x.reshape(M, H)
    wp = w.astype(cdt)
    bp = b.astype(jnp.float32).reshape(1, H)
    if Hp != H:
        # Small-H fallback: pad hidden dim once so stores stay lane-dense.
        x2d = jnp.pad(x2d, ((0, 0), (0, Hp - H)))
        wp = jnp.pad(wp, ((0, Hp - H), (0, Hp - H)))
        bp = jnp.pad(bp, ((0, 0), (0, Hp - H)))

    # ---- column tiling: keep W resident while cheap, else N-tile it ----
    if Hp * Hp * esize <= 8 * 1024 * 1024:          # <=16 MiB double-buffered
        tn = Hp
    else:
        tn = 128
        for cand in (512, 256):
            if Hp % cand == 0 and 2 * Hp * cand * esize <= 8 * 1024 * 1024:
                tn = cand
                break

    # ---- row tiling ----
    tm = _pick_tm(M)
    # Shrink the row tile if the double-buffered working set would blow VMEM
    # (48 MiB scoped limit; keeps v7x's 64 MiB physical VMEM safe).
    while tm > 8 and (2 * tm * Hp * esize + 2 * tm * tn * esize
                      + 2 * Hp * tn * esize) > 40 * 1024 * 1024:
        tm = max(8, _round_up(tm // 2, 8))

    grid = (pl.cdiv(M, tm), Hp // tn)      # ragged M handled by boundary blocks

    cost = pl.CostEstimate(
        flops=2 * M * Hp * Hp,
        transcendentals=0,
        bytes_accessed=2 * M * Hp * esize + Hp * Hp * esize + Hp * 4,
    )

    out2d = pl.pallas_call(
        _make_kernel(tn, Hp),
        out_shape=jax.ShapeDtypeStruct((M, Hp), cdt),   # native dtype, no epilogue cast
        grid_spec=pltpu.PrefetchScalarGridSpec(
            num_scalar_prefetch=0,
            grid=grid,
            in_specs=[
                pl.BlockSpec((tm, Hp), lambda i, j: (i, 0)),   # x row tile (full K), pipelined
                pl.BlockSpec((Hp, tn), lambda i, j: (0, j)),   # W column block (resident if tn==Hp)
                pl.BlockSpec((1, tn), lambda i, j: (0, j)),    # bias column block (f32)
            ],
            out_specs=pl.BlockSpec((tm, tn), lambda i, j: (i, j)),
        ),
        compiler_params=pltpu.CompilerParams(
            dimension_semantics=("parallel", "parallel"),      # dual-TC shard on v7x
            vmem_limit_bytes=48 * 1024 * 1024,                 # safe on v5e/v6e/v7x
        ),
        cost_estimate=cost,
    )(x2d, wp, bp)

    if Hp != H:
        out2d = out2d[:, :H]               # only on the small-H fallback path
    return out2d.reshape(B, S, H)


def reference_forward(x, w, b, mask=None):
    """Pure-JAX reference: input + module(input)."""
    del mask
    return x + (jnp.einsum("bsh,hk->bsk", x, w) + b)


if __name__ == "__main__":
    key = jax.random.PRNGKey(0)
    kx, kw, kb = jax.random.split(key, 3)

    B, S, H = 2, 8, 32  # batch, sequence (graph nodes), hidden
    x = jax.random.normal(kx, (B, S, H), dtype=jnp.float32)
    # Deterministic "Linear(H, H)"-style parameters (Kaiming-ish scale).
    w = jax.random.normal(kw, (H, H), dtype=jnp.float32) * (1.0 / (H ** 0.5))
    b = jax.random.normal(kb, (H,), dtype=jnp.float32) * 0.01

    out = jax.block_until_ready(skip_connection_forward(x, w, b, mask=None))
    assert out.shape == (B, S, H)
    assert out.dtype == x.dtype

    ref = reference_forward(x, w, b)
    assert jnp.allclose(out, ref, atol=2e-2, rtol=2e-2), "mismatch vs reference"

    print("KERNEL_OK")
</pallas_src>

<mosaic_0001>
module attributes {stable_mosaic.version = 11 : i64} {
  func.func @kernel(%arg0: i32, %arg1: i32, %arg2: memref<8x128xf32, #tpu.memory_space<vmem>>, %arg3: memref<128x128xf32, #tpu.memory_space<vmem>>, %arg4: memref<1x128xf32, #tpu.memory_space<vmem>>, %arg5: memref<8x128xf32, #tpu.memory_space<vmem>>) attributes {dimension_semantics = [#tpu.dimension_semantics<parallel>, #tpu.dimension_semantics<parallel>], iteration_bounds = array<i64: 2, 1>, scalar_prefetch = 0 : i64, scratch_operands = 0 : i64, tpu.core_type = #tpu.core_type<tc>, window_params = [{transform_indices = @transform_0, window_bounds = array<i64: 8, 128>}, {transform_indices = @transform_1, window_bounds = array<i64: 128, 128>}, {transform_indices = @transform_2, window_bounds = array<i64: 1, 128>}, {transform_indices = @transform_3, window_bounds = array<i64: 8, 128>}]} {
    %c0 = arith.constant 0 : index
    %c0_0 = arith.constant 0 : index
    %0 = vector.load %arg2[%c0, %c0_0] : memref<8x128xf32, #tpu.memory_space<vmem>>, vector<8x128xf32>
    %c0_1 = arith.constant 0 : index
    %c0_2 = arith.constant 0 : index
    %1 = vector.load %arg3[%c0_1, %c0_2] : memref<128x128xf32, #tpu.memory_space<vmem>>, vector<128x128xf32>
    %cst = arith.constant dense<0.000000e+00> : vector<8x128xf32>
    %2 = tpu.matmul %0, %1, %cst {dimension_numbers = #tpu.dot_dimension_numbers<[1], [0], [0], [1], [0, 0, 1, 1], [], []>} : vector<8x128xf32>, vector<128x128xf32>, vector<8x128xf32> -> vector<8x128xf32>
    %3 = arith.addf %0, %2 : vector<8x128xf32>
    %c0_3 = arith.constant 0 : index
    %c0_4 = arith.constant 0 : index
    %4 = vector.load %arg4[%c0_3, %c0_4] : memref<1x128xf32, #tpu.memory_space<vmem>>, vector<1x128xf32>
    %5 = vector.broadcast %4 : vector<1x128xf32> to vector<8x128xf32>
    %6 = arith.addf %3, %5 : vector<8x128xf32>
    %c0_5 = arith.constant 0 : index
    %c0_6 = arith.constant 0 : index
    %7 = vector.load %arg5[%c0_5, %c0_6] : memref<8x128xf32, #tpu.memory_space<vmem>>, vector<8x128xf32>
    tpu.vector_store %arg5[%c0_5, %c0_6], %6 {strides = array<i32>} : memref<8x128xf32, #tpu.memory_space<vmem>>, vector<8x128xf32>,
    return
  }
  func.func @transform_0(%arg0: i32, %arg1: i32) -> (i32, i32) {
    %c0_i32 = arith.constant 0 : i32
    %c0_i32_0 = arith.constant 0 : i32
    return %arg0, %c0_i32 : i32, i32
  }
  func.func @transform_1(%arg0: i32, %arg1: i32) -> (i32, i32) {
    %c0_i32 = arith.constant 0 : i32
    %c0_i32_0 = arith.constant 0 : i32
    return %c0_i32, %arg1 : i32, i32
  }
  func.func @transform_2(%arg0: i32, %arg1: i32) -> (i32, i32) {
    %c0_i32 = arith.constant 0 : i32
    %c0_i32_0 = arith.constant 0 : i32
    return %c0_i32, %arg1 : i32, i32
  }
  func.func @transform_3(%arg0: i32, %arg1: i32) -> (i32, i32) {
    %c0_i32 = arith.constant 0 : i32
    return %arg0, %arg1 : i32, i32
  }
}

</mosaic_0001>

<llo_original>
// kernel: skip_connection_forward.1
$region0: #{skip_connection_forward.1}
  #allocation0 [shape = 'u32[]', space=smem, size = 0x4, offset = 0x4, fixed_abs, tag = 'smem constant byte address 0x4 - core index']
  #allocation1 [shape = 'u32[144,128]{1,0:T(1,128)}', space=vmem, size = 0x12000, scoped, tag = 'internal scratch']
  %s0 = inlined_call_operand.vmem [shape: f32[16,128], index: 0, kind: input, shape index: {}]
  %s1 = inlined_call_operand.vmem [shape: f32[128,128], index: 1, kind: input, shape index: {}]
  %s2 = inlined_call_operand.vmem [shape: f32[1,128], index: 2, kind: input, shape index: {}]
  %s3 = inlined_call_operand.vmem [shape: f32[16,128], index: 3, kind: output, shape index: {}]
  %s4 = sld [smem:[#allocation0]]
  $region45: #{skip_connection_forward.1} parent=0
    _
  %s6 = ssub.s32 1, %s4
  %s7 = scalar_select 0, %s6, %s4
  loop: start=0, step=1, limit=4
  $region2: #{skip_connection_forward.1} parent=0 // loop_pre_header
    _
  $region3: #{skip_connection_forward.1} parent=0 // loop_header
    %s9 = sphi 0, %s13
    %p10 = scmp.ge.s32.totalorder %s9, 4
    %s16 = sphi 0, %s28
    %s17 = sphi 0, %s24
    %s18 = sphi 0, %s16
    %s19 = sphi 0, %s17
    %s20 = sphi 0, %s18
    %s21 = sphi 0, %s19
    %s31 = sphi 0, %s33
    %s34 = sphi 0, %s31
    %s35 = sphi 0, %s34
    %s51 = sphi 0, %s35
    %s57 = sphi 0, %s59
    %s60 = sphi 0, %s57
    %s61 = sphi 0, %s60
    %s77 = sphi 0, %s61
    %s83 = sphi 0, %s85
    %s86 = sphi 0, %s83
    %s87 = sphi 0, %s86
    %s103 = sphi 0, %s87
    %s111 = sphi 0, %s113
    %s114 = sphi 0, %s111
    %s115 = sphi 0, %s114
    %s131 = sphi 0, %s115
  $region4: #{skip_connection_forward.1} parent=0 // loop_header_branch
    %12 = sbr.rel (%p10) target = $region8
  $region5: #{skip_connection_forward.1} parent=0 // loop_body
    %s14 = ssub.s32 %s9, 1
    %s15 = ssub.s32 %s9, 2
    %s22 = sadd.s32 1, %s17
    %p23 = scmp.ge.s32.totalorder %s22, 1
    %s24 = scalar_select %p23, 0, %s22
    %s25 = sadd.s32 1, %s16
    %s26 = scalar_select %p23, %s25, %s16
    %p27 = scmp.ge.s32.totalorder %s26, 2
    %s28 = scalar_select %p27, 0, %s26
    %s29 = ssub.s32 %s16, %s28
    %p30 = scmp.eq.s32.totalorder %s29, 0
    %s32 = sadd.s32 %s31, 1
    %s33 = scalar_select %p30, %s31, %s32
    %p36 = pneg %p30
    %p37 = scmp.eq.s32.totalorder %s9, 1
    %p38 = por %p36, %p37
    %p39 = scmp.ne.s32.totalorder %s31, %s34
    %p40 = scmp.eq.s32.totalorder %s9, 0
    %p41 = por %p39, %p40
    %p42 = scmp.ne.s32.totalorder %s31, %s34
    %p43 = scmp.eq.s32.totalorder %s14, 1
    %p44 = por %p42, %p43
    %p45 = scmp.ne.s32.totalorder %s34, %s35
    %p46 = scmp.eq.s32.totalorder %s14, 0
    %p47 = por %p45, %p46
    %p48 = scmp.ne.s32.totalorder %s34, %s35
    %p49 = scmp.eq.s32.totalorder %s15, 1
    %p50 = por %p48, %p49
    %p52 = scmp.ne.s32.totalorder %s35, %s51
    %p53 = scmp.eq.s32.totalorder %s15, 0
    %p54 = por %p52, %p53
    %s55 = ssub.s32 %s17, %s24
    %p56 = scmp.eq.s32.totalorder %s55, 0
    %s58 = sadd.s32 %s57, 1
    %s59 = scalar_select %p56, %s57, %s58
    %p62 = pneg %p56
    %p63 = scmp.eq.s32.totalorder %s9, 1
    %p64 = por %p62, %p63
    %p65 = scmp.ne.s32.totalorder %s57, %s60
    %p66 = scmp.eq.s32.totalorder %s9, 0
    %p67 = por %p65, %p66
    %p68 = scmp.ne.s32.totalorder %s57, %s60
    %p69 = scmp.eq.s32.totalorder %s14, 1
    %p70 = por %p68, %p69
    %p71 = scmp.ne.s32.totalorder %s60, %s61
    %p72 = scmp.eq.s32.totalorder %s14, 0
    %p73 = por %p71, %p72
    %p74 = scmp.ne.s32.totalorder %s60, %s61
    %p75 = scmp.eq.s32.totalorder %s15, 1
    %p76 = por %p74, %p75
    %p78 = scmp.ne.s32.totalorder %s61, %s77
    %p79 = scmp.eq.s32.totalorder %s15, 0
    %p80 = por %p78, %p79
    %s81 = ssub.s32 %s17, %s24
    %p82 = scmp.eq.s32.totalorder %s81, 0
    %s84 = sadd.s32 %s83, 1
    %s85 = scalar_select %p82, %s83, %s84
    %p88 = pneg %p82
    %p89 = scmp.eq.s32.totalorder %s9, 1
    %p90 = por %p88, %p89
    %p91 = scmp.ne.s32.totalorder %s83, %s86
    %p92 = scmp.eq.s32.totalorder %s9, 0
    %p93 = por %p91, %p92
    %p94 = scmp.ne.s32.totalorder %s83, %s86
    %p95 = scmp.eq.s32.totalorder %s14, 1
    %p96 = por %p94, %p95
    %p97 = scmp.ne.s32.totalorder %s86, %s87
    %p98 = scmp.eq.s32.totalorder %s14, 0
    %p99 = por %p97, %p98
    %p100 = scmp.ne.s32.totalorder %s86, %s87
    %p101 = scmp.eq.s32.totalorder %s15, 1
    %p102 = por %p100, %p101
    %p104 = scmp.ne.s32.totalorder %s87, %s103
    %p105 = scmp.eq.s32.totalorder %s15, 0
    %p106 = por %p104, %p105
    %s107 = ssub.s32 %s16, %s28
    %s108 = ssub.s32 %s17, %s24
    %s109 = sor.u32 %s107, %s108
    %p110 = scmp.eq.s32.totalorder %s109, 0
    %s112 = sadd.s32 %s111, 1
    %s113 = scalar_select %p110, %s111, %s112
    %p116 = pneg %p110
    %p117 = scmp.eq.s32.totalorder %s9, 1
    %p118 = por %p116, %p117
    %p119 = scmp.ne.s32.totalorder %s111, %s114
    %p120 = scmp.eq.s32.totalorder %s9, 0
    %p121 = por %p119, %p120
    %p122 = scmp.ne.s32.totalorder %s111, %s114
    %p123 = scmp.eq.s32.totalorder %s14, 1
    %p124 = por %p122, %p123
    %p125 = scmp.ne.s32.totalorder %s114, %s115
    %p126 = scmp.eq.s32.totalorder %s14, 0
    %p127 = por %p125, %p126
    %p128 = scmp.ne.s32.totalorder %s114, %s115
    %p129 = scmp.eq.s32.totalorder %s15, 1
    %p130 = por %p128, %p129
    %p132 = scmp.ne.s32.totalorder %s115, %s131
    %p133 = scmp.eq.s32.totalorder %s15, 0
    %p134 = por %p132, %p133
    %p135 = scmp.le.s32.totalorder 1, %s9
    %p136 = scmp.lt.s32.totalorder %s9, 3
    %p137 = pnand %p135, %p136
    %p138 = pneg %p137
    // Predicated region
    $region9: #{skip_connection_forward.1} parent=5 // pred_check
      _
    $region10: #{skip_connection_forward.1} parent=5 // pred_check_branch
      %140 = sbr.rel (%p137) target = $region12
    $region11: #{skip_connection_forward.1} parent=5 // pred_region
      %s141 = ssub.s32 %s9, 1
      // Predicated region
      $region13: #{skip_connection_forward.1} parent=11 // pred_check
        %p142 = pneg %p73
      $region14: #{skip_connection_forward.1} parent=11 // pred_check_branch
        %144 = sbr.rel (%p142) target = $region16
      $region15: #{skip_connection_forward.1} parent=11 // pred_region
        %p145 = scmp.lt.s32.totalorder %s19, 0
        %s146 = scalar_select %p145, %s19, 0
        %s147 = smul.addr %s146, 8
        %s148 = scalar_lea.vmem %s1, %s147
      $region16: #{skip_connection_forward.1} parent=11 // pred_fallthru
        _
      // Predicated region
      $region17: #{skip_connection_forward.1} parent=11 // pred_check
        %p149 = pneg %p99
      $region18: #{skip_connection_forward.1} parent=11 // pred_check_branch
        %151 = sbr.rel (%p149) target = $region20
      $region19: #{skip_connection_forward.1} parent=11 // pred_region
        %p152 = scmp.lt.s32.totalorder %s19, 0
        %s153 = scalar_select %p152, %s19, 0
        %s154 = scalar_lea.vmem %s2, %s153
      $region20: #{skip_connection_forward.1} parent=11 // pred_fallthru
        _
    $region12: #{skip_connection_forward.1} parent=5 // pred_fallthru
      _
    %p155 = scmp.lt.s32.totalorder %s9, 2
    // Predicated region
    $region21: #{skip_connection_forward.1} parent=5 // pred_check
      %p156 = pneg %p155
    $region22: #{skip_connection_forward.1} parent=5 // pred_check_branch
      %158 = sbr.rel (%p156) target = $region24
    $region23: #{skip_connection_forward.1} parent=5 // pred_region
      // Predicated region
      $region25: #{skip_connection_forward.1} parent=23 // pred_check
        %p159 = pneg %p41
      $region26: #{skip_connection_forward.1} parent=23 // pred_check_branch
        %161 = sbr.rel (%p159) target = $region28
      $region27: #{skip_connection_forward.1} parent=23 // pred_region
        %p162 = scmp.lt.s32.totalorder %s16, 1
        %s163 = scalar_select %p162, %s16, 1
        %s164 = smul.addr %s163, 8
        %s165 = scalar_lea.vmem %s0, %s164
      $region28: #{skip_connection_forward.1} parent=23 // pred_fallthru
        _
    $region24: #{skip_connection_forward.1} parent=5 // pred_fallthru
      _
    %p166 = scmp.le.s32.totalorder 1, %s9
    %p167 = scmp.lt.s32.totalorder %s9, 3
    %p168 = pnand %p166, %p167
    %p169 = pneg %p168
    // Predicated region
    $region29: #{skip_connection_forward.1} parent=5 // pred_check
      _
    $region30: #{skip_connection_forward.1} parent=5 // pred_check_branch
      %171 = sbr.rel (%p168) target = $region32
    $region31: #{skip_connection_forward.1} parent=5 // pred_region
      %s172 = ssub.s32 %s9, 1
      %p173 = scmp.lt.s32.totalorder %s18, 1
      %s174 = scalar_select %p173, %s18, 1
      %s175 = smul.addr %s174, 8
      %s176 = scalar_lea.vmem %s0, %s175
      %p177 = pneg %p47
      %p178 = pneg %p44
      %p179 = scmp.lt.s32.totalorder %s19, 0
      %s180 = scalar_select %p179, %s19, 0
      %s181 = smul.addr %s180, 8
      %s182 = scalar_lea.vmem %s1, %s181
      %p183 = pneg %p73
      %p184 = pneg %p70
      %p185 = scmp.lt.s32.totalorder %s19, 0
      %s186 = scalar_select %p185, %s19, 0
      %s187 = scalar_lea.vmem %s2, %s186
      %p188 = pneg %p99
      %p189 = pneg %p96
      %p190 = pneg %p127
      %p191 = pneg %p124
      %p192 = scmp.lt.s32.totalorder %s18, 1
      %s193 = scalar_select %p192, %s18, 1
      %p194 = scmp.lt.s32.totalorder %s19, 0
      %s195 = scalar_select %p194, %s19, 0
      %s196 = sadd.s32 %s195, %s193
      %s197 = smul.addr %s196, 8
      %s198 = scalar_lea.vmem %s3, %s197
      %p199 = scmp.lt.s32.totalorder %s18, 1
      %s200 = scalar_select %p199, %s18, 1
      %s201 = smul.addr %s200, 8
      %s202 = scalar_lea.vmem %s0, %s201
      %p203 = scmp.lt.s32.totalorder %s19, 0
      %s204 = scalar_select %p203, %s19, 0
      %s205 = smul.addr %s204, 8
      %s206 = scalar_lea.vmem %s1, %s205
      %p207 = scmp.lt.s32.totalorder %s19, 0
      %s208 = scalar_select %p207, %s19, 0
      %s209 = scalar_lea.vmem %s2, %s208
      %p210 = scmp.lt.s32.totalorder %s18, 1
      %s211 = scalar_select %p210, %s18, 1
      %p212 = scmp.lt.s32.totalorder %s19, 0
      %s213 = scalar_select %p212, %s19, 0
      %s214 = sadd.s32 %s213, %s211
      %s215 = smul.addr %s214, 8
      %s216 = scalar_lea.vmem %s3, %s215
      %v217 = vld [vmem:[%s202] sm:$0xff]
      %v218 = vld [vmem:[%s206] sm:$0xff]
      %v219 = vld [vmem:[%s206 + $0x8] sm:$0xff]
      %v220 = vld [vmem:[%s206 + $0x10] sm:$0xff]
      %v221 = vld [vmem:[%s206 + $0x18] sm:$0xff]
      %v222 = vld [vmem:[%s206 + $0x20] sm:$0xff]
      %v223 = vld [vmem:[%s206 + $0x28] sm:$0xff]
      %v224 = vld [vmem:[%s206 + $0x30] sm:$0xff]
      %v225 = vld [vmem:[%s206 + $0x38] sm:$0xff]
      %v226 = vld [vmem:[%s206 + $0x40] sm:$0xff]
      %v227 = vld [vmem:[%s206 + $0x48] sm:$0xff]
      %v228 = vld [vmem:[%s206 + $0x50] sm:$0xff]
      %v229 = vld [vmem:[%s206 + $0x58] sm:$0xff]
      %v230 = vld [vmem:[%s206 + $0x60] sm:$0xff]
      %v231 = vld [vmem:[%s206 + $0x68] sm:$0xff]
      %v232 = vld [vmem:[%s206 + $0x70] sm:$0xff]
      %v233 = vld [vmem:[%s206 + $0x78] sm:$0xff]
      %234 = vmatprep.subr.mxu0 0.0
      %235 = vmatpush1.msra.mxu0 %v233
      %236 = vmatprep.subr.mxu0 0.0
      %237 = vmatpush1.msra.mxu0 %v232
      %238 = vmatprep.subr.mxu0 0.0
      %239 = vmatpush1.msra.mxu0 %v231
      %240 = vmatprep.subr.mxu0 0.0
      %241 = vmatpush1.msra.mxu0 %v230
      %242 = vmatprep.subr.mxu0 0.0
      %243 = vmatpush1.msra.mxu0 %v229
      %244 = vmatprep.subr.mxu0 0.0
      %245 = vmatpush1.msra.mxu0 %v228
      %246 = vmatprep.subr.mxu0 0.0
      %247 = vmatpush1.msra.mxu0 %v227
      %248 = vmatprep.subr.mxu0 0.0
      %249 = vmatpush1.msra.mxu0 %v226
      %250 = vmatprep.subr.mxu0 0.0
      %251 = vmatpush1.msra.mxu0 %v225
      %252 = vmatprep.subr.mxu0 0.0
      %253 = vmatpush1.msra.mxu0 %v224
      %254 = vmatprep.subr.mxu0 0.0
      %255 = vmatpush1.msra.mxu0 %v223
      %256 = vmatprep.subr.mxu0 0.0
      %257 = vmatpush1.msra.mxu0 %v222
      %258 = vmatprep.subr.mxu0 0.0
      %259 = vmatpush1.msra.mxu0 %v221
      %260 = vmatprep.subr.mxu0 0.0
      %261 = vmatpush1.msra.mxu0 %v220
      %262 = vmatprep.subr.mxu0 0.0
      %263 = vmatpush1.msra.mxu0 %v219
      %264 = vmatprep.subr.mxu0 0.0
      %265 = vmatpush1.msra.mxu0 %v218
      %266 = vmatprep.subr.mxu0 0.0
      %267 = vmatpush2.msra.mxu0 0.0
      %268 = vmatprep.subr.mxu0 0.0
      %269 = vmatpush2.msra.mxu0 0.0
      %270 = vmatprep.subr.mxu0 0.0
      %271 = vmatpush2.msra.mxu0 0.0
      %272 = vmatprep.subr.mxu0 0.0
      %273 = vmatpush2.msra.mxu0 0.0
      %274 = vmatprep.subr.mxu0 0.0
      %275 = vmatpush2.msra.mxu0 0.0
      %276 = vmatprep.subr.mxu0 0.0
      %277 = vmatpush2.msra.mxu0 0.0
      %278 = vmatprep.subr.mxu0 0.0
      %279 = vmatpush2.msra.mxu0 0.0
      %280 = vmatprep.subr.mxu0 0.0
      %281 = vmatpush2.msra.mxu0 0.0
      %282 = vmatprep.subr.mxu0 0.0
      %283 = vmatpush2.msra.mxu0 0.0
      %284 = vmatprep.subr.mxu0 0.0
      %285 = vmatpush2.msra.mxu0 0.0
      %286 = vmatprep.subr.mxu0 0.0
      %287 = vmatpush2.msra.mxu0 0.0
      %288 = vmatprep.subr.mxu0 0.0
      %289 = vmatpush2.msra.mxu0 0.0
      %290 = vmatprep.subr.mxu0 0.0
      %291 = vmatpush2.msra.mxu0 0.0
      %292 = vmatprep.subr.mxu0 0.0
      %293 = vmatpush2.msra.mxu0 0.0
      %294 = vmatprep.subr.mxu0 0.0
      %295 = vmatpush2.msra.mxu0 0.0
      %296 = vmatprep.subr.mxu0 0.0
      %297 = vmatpush2.msra.mxu0 0.0
      %298 = vmatprep.mubr.f32.mxu0 0.0
      %299 = vmatmul.mubr.f32.gmra.mxu0 %v217
      %v300 = vpop.f32.mrf.mxu0
      %v301 = vadd.f32 0.0, %v300
      %v302 = vpop.f32.mrf.mxu0
      %303 = vdwg.mxu0
      %v304 = vadd.f32 %v217, %v301
      %v305 = vld [vmem:[%s209] sm:$0x1]
      %v307 = vlaneseq
      %v308 = vshrl.u32 %v307, 7
      %v309 = vsub.s32 0, %v308
      %v310 = vrot.slane %v305, %v309
      %v312 = vadd.f32 %v304, %v310
      %313 = vst [vmem:[%s216] sm:$0xff] %v312
      %p314 = scmp.lt.s32.totalorder %s18, 1
      %s315 = scalar_select %p314, %s18, 1
      %p316 = scmp.lt.s32.totalorder %s19, 0
      %s317 = scalar_select %p316, %s19, 0
      %s318 = sadd.s32 %s317, %s315
      %s319 = smul.addr %s318, 8
      %s320 = scalar_lea.vmem %s3, %s319
      // Predicated region
      $region33: #{skip_connection_forward.1} parent=31 // pred_check
        %p321 = pneg %p124
      $region34: #{skip_connection_forward.1} parent=31 // pred_check_branch
        %323 = sbr.rel (%p321) target = $region36
      $region35: #{skip_connection_forward.1} parent=31 // pred_region
        _
      $region36: #{skip_connection_forward.1} parent=31 // pred_fallthru
        _
    $region32: #{skip_connection_forward.1} parent=5 // pred_fallthru
      _
    %p324 = scmp.le.s32.totalorder 2, %s9
    // Predicated region
    $region37: #{skip_connection_forward.1} parent=5 // pred_check
      %p325 = pneg %p324
    $region38: #{skip_connection_forward.1} parent=5 // pred_check_branch
      %327 = sbr.rel (%p325) target = $region40
    $region39: #{skip_connection_forward.1} parent=5 // pred_region
      %s328 = ssub.s32 %s9, 2
      // Predicated region
      $region41: #{skip_connection_forward.1} parent=39 // pred_check
        %p329 = pneg %p130
      $region42: #{skip_connection_forward.1} parent=39 // pred_check_branch
        %331 = sbr.rel (%p329) target = $region44
      $region43: #{skip_connection_forward.1} parent=39 // pred_region
        %p332 = scmp.lt.s32.totalorder %s20, 1
        %s333 = scalar_select %p332, %s20, 1
        %p334 = scmp.lt.s32.totalorder %s21, 0
        %s335 = scalar_select %p334, %s21, 0
        %s336 = sadd.s32 %s335, %s333
        %s337 = smul.addr %s336, 8
        %s338 = scalar_lea.vmem %s3, %s337
      $region44: #{skip_connection_forward.1} parent=39 // pred_fallthru
        _
    $region40: #{skip_connection_forward.1} parent=5 // pred_fallthru
      _
  $region6: #{skip_connection_forward.1} parent=0 // loop_footer
    %s13 = sadd.s32 1, %s9
  $region7: #{skip_connection_forward.1} parent=0 // loop_footer_branch
    %8 = sbr.rel target = $region3
  $region8: #{skip_connection_forward.1} parent=0 // loop_exit
    _

</llo_original>
